<compile_context>
chip_gen: v7x
topology: tpu7x:2x2x1
jax: 0.10.0
libtpu: 0.0.40
codegen_flags: <defaults>
</compile_context>

<pallas_src>
import functools

import jax
import jax.numpy as jnp
from jax.experimental import pallas as pl
from jax.experimental.pallas import tpu as pltpu

LANE = 128


def _round_up(n, m):
    return ((n + m - 1) // m) * m


# ----------------------------------------------------------------------------
# Kernel
# ----------------------------------------------------------------------------
def garch_lstm_seq_kernel(
    garch_ref,       # SMEM (4,): omega, alpha, beta, gamma (reparameterized)
    x_ref,           # VMEM (T, B, 1)  demeaned input sequence
    s0_ref,          # VMEM (B, 1)     initial hidden sigma^2
    c0_ref,          # VMEM (B, Hp)    initial hidden memory (zero-padded)
    sig2p0_ref,      # VMEM (B, 1)     initial GARCH sig2_prev state
    wall_ref,        # VMEM (2, 3*Hp)  fused gate weights (F/i columns pre-scaled 0.5)
    ball_ref,        # VMEM (1, 3*Hp)  fused gate biases  (F/i columns pre-scaled 0.5)
    wout_ref,        # VMEM (1, Hp)    output projection weight (zero-padded)
    sig2_seq_ref,    # out VMEM (T, B, 1) hidden_sig2 per timestep
    c_out_ref,       # out VMEM (B, Hp)   final hidden memory (padded)
    sig2p_out_ref,   # out VMEM (B, 1)    final sig2_prev
    *,
    seq_len,
    hp,
):
    # ---- loop-invariant loads / broadcasts (hoisted out of the time loop) ----
    w0 = wall_ref[0:1, :]          # (1, 3*Hp) multiplies x
    w1 = wall_ref[1:2, :]          # (1, 3*Hp) multiplies hidden_sig2
    b_all = ball_ref[...]          # (1, 3*Hp)
    w_out = wout_ref[...]          # (1, Hp)

    batch = s0_ref.shape[0]
    omega_b = jnp.full((batch, 1), garch_ref[0], jnp.float32)
    alpha_b = jnp.full((batch, 1), garch_ref[1], jnp.float32)
    beta_b = jnp.full((batch, 1), garch_ref[2], jnp.float32)
    gamma_b = jnp.full((batch, 1), garch_ref[3], jnp.float32)

    def step(t, carry):
        s, c, sig2_prev = carry            # (B,1), (B,Hp), (B,1)
        x = x_ref[t]                       # (B, 1)

        # Fused gates: one broadcast mul-add chain + one tanh over all 3 gates.
        # sigmoid(z) = 0.5*tanh(0.5*z) + 0.5 (0.5 folded into packed F/i cols).
        z = x * w0 + s * w1 + b_all        # (B, 3*Hp)
        tz = jnp.tanh(z)                   # single EUP pass
        f_gate = 0.5 * tz[:, 0 * hp:1 * hp] + 0.5
        i_gate = 0.5 * tz[:, 1 * hp:2 * hp] + 0.5
        c_sq = tz[:, 2 * hp:3 * hp]

        # GJR-GARCH(1,1): mean model is zero, so resids_t == x.
        i_neg = (x < 0.0).astype(jnp.float32)
        sig2_t = omega_b + x * x * (alpha_b + gamma_b * i_neg) + sig2_prev * beta_b

        # LSTM-style memory update + H->1 projection (VPU mul + XLU lane reduce).
        c_new = f_gate * c + i_gate * c_sq                               # (B, Hp)
        proj = jnp.sum(jnp.tanh(c_new) * w_out, axis=-1, keepdims=True)  # (B, 1)
        s_new = sig2_t * (1.0 + proj)                                    # (B, 1)

        sig2_seq_ref[t] = s_new
        return (s_new, c_new, sig2_t)

    s_f, c_f, sig2p_f = jax.lax.fori_loop(
        0, seq_len, step, (s0_ref[...], c0_ref[...], sig2p0_ref[...])
    )

    c_out_ref[...] = c_f
    sig2p_out_ref[...] = sig2p_f


# ----------------------------------------------------------------------------
# Parameter handling
# ----------------------------------------------------------------------------
def init_params(key, hidden_size):
    """Parameters in the PyTorch module's layout (weights stored transposed)."""
    ks = jax.random.split(key, 7)
    bound_gate = 1.0 / jnp.sqrt(2.0)                 # fan_in = 2
    bound_out = 1.0 / jnp.sqrt(float(hidden_size))   # fan_in = H
    u = lambda k, shp, b: jax.random.uniform(k, shp, jnp.float32, -b, b)
    return {
        "raw": (jnp.float32(0.0), jnp.float32(0.1), jnp.float32(0.8), jnp.float32(0.5)),
        "Wf": u(ks[0], (2, hidden_size), bound_gate),
        "bf": u(ks[1], (1, hidden_size), bound_gate),
        "Wi": u(ks[2], (2, hidden_size), bound_gate),
        "bi": u(ks[3], (1, hidden_size), bound_gate),
        "Wc": u(ks[4], (2, hidden_size), bound_gate),
        "bc": u(ks[5], (1, hidden_size), bound_gate),
        "w":  u(ks[6], (1, hidden_size), bound_out),
    }


def pack_params(params):
    """One-time packing: fuse gates into lane-padded slabs (done once, not per step)."""
    h = params["Wf"].shape[1]
    hp = max(LANE, _round_up(h, LANE))
    w_all = jnp.zeros((2, 3 * hp), jnp.float32)
    b_all = jnp.zeros((1, 3 * hp), jnp.float32)
    # Fold the inner 0.5 of sigmoid(z)=0.5*tanh(0.5*z)+0.5 into the F/i columns.
    w_all = w_all.at[:, 0:h].set(0.5 * params["Wf"])
    w_all = w_all.at[:, hp:hp + h].set(0.5 * params["Wi"])
    w_all = w_all.at[:, 2 * hp:2 * hp + h].set(params["Wc"])
    b_all = b_all.at[:, 0:h].set(0.5 * params["bf"])
    b_all = b_all.at[:, hp:hp + h].set(0.5 * params["bi"])
    b_all = b_all.at[:, 2 * hp:2 * hp + h].set(params["bc"])
    w_out = jnp.zeros((1, hp), jnp.float32).at[:, :h].set(params["w"])
    return {"raw": params["raw"], "W_all": w_all, "b_all": b_all, "w_out": w_out}


# ----------------------------------------------------------------------------
# Wrappers
# ----------------------------------------------------------------------------
@jax.jit
def garch_lstm_sequence(packed, x_seq, sig2_h0, c0, sig2_prev0):
    """Run the GARCHLSTMCell forward over a whole sequence in one kernel.

    x_seq: (T, B, 1), sig2_h0/sig2_prev0: (B, 1), c0: (B, H).
    Returns (hidden_sig2 per step (T,B,1), final hidden_memory (B,H), final sig2_prev (B,1)).
    """
    seq_len, batch, _ = x_seq.shape
    h = c0.shape[1]
    hp = packed["W_all"].shape[1] // 3

    # GARCH reparameterization (scalar glue) — fused into this jit / XLA program.
    raw_omega, raw_alpha, raw_beta, raw_gamma = packed["raw"]
    omega = jax.nn.softplus(raw_omega) / 100.0
    a_u, b_u, g_u = jnp.exp(raw_alpha), jnp.exp(raw_beta), jnp.exp(raw_gamma)
    denom = 1.0 + a_u + b_u + g_u / 2.0
    garch = jnp.stack([omega, a_u / denom, b_u / denom, g_u / denom]).astype(jnp.float32)

    c0_p = jnp.pad(c0, ((0, 0), (0, hp - h)))

    vmem = pl.BlockSpec(memory_space=pltpu.MemorySpace.VMEM)
    smem = pl.BlockSpec(memory_space=pltpu.MemorySpace.SMEM)

    out_shapes = (
        jax.ShapeDtypeStruct((seq_len, batch, 1), jnp.float32),  # hidden_sig2 per step
        jax.ShapeDtypeStruct((batch, hp), jnp.float32),          # final hidden_memory (padded)
        jax.ShapeDtypeStruct((batch, 1), jnp.float32),           # final sig2_prev
    )

    kernel = functools.partial(garch_lstm_seq_kernel, seq_len=seq_len, hp=hp)
    sig2_seq, c_fin_p, sig2p_fin = pl.pallas_call(
        kernel,
        out_shape=out_shapes,
        in_specs=[smem] + [vmem] * 7,
        out_specs=(vmem, vmem, vmem),
    )(garch, x_seq, sig2_h0, c0_p, sig2_prev0,
      packed["W_all"], packed["b_all"], packed["w_out"])

    return sig2_seq, c_fin_p[:, :h], sig2p_fin


def garch_lstm_cell(packed, x, sig2_h, c, sig2_prev):
    """Single forward step (matches GARCHLSTMCell.forward + its sig2_prev update)."""
    sig2_seq, c_fin, sig2p_fin = garch_lstm_sequence(packed, x[None], sig2_h, c, sig2_prev)
    return sig2_seq[0], c_fin, sig2p_fin


# ----------------------------------------------------------------------------
# Pure-JAX reference (mirrors the PyTorch module)
# ----------------------------------------------------------------------------
def _reparam(params):
    raw_omega, raw_alpha, raw_beta, raw_gamma = params["raw"]
    omega = jax.nn.softplus(raw_omega) / 100.0
    a_u, b_u, g_u = jnp.exp(raw_alpha), jnp.exp(raw_beta), jnp.exp(raw_gamma)
    denom = 1.0 + a_u + b_u + g_u / 2.0
    return omega, a_u / denom, b_u / denom, g_u / denom


def reference_cell(params, x, sig2_h, c, sig2_prev):
    zf = x * params["Wf"][0:1] + sig2_h * params["Wf"][1:2] + params["bf"]
    zi = x * params["Wi"][0:1] + sig2_h * params["Wi"][1:2] + params["bi"]
    zc = x * params["Wc"][0:1] + sig2_h * params["Wc"][1:2] + params["bc"]
    f_gate, i_gate, c_sq = jax.nn.sigmoid(zf), jax.nn.sigmoid(zi), jnp.tanh(zc)
    omega, alpha, beta, gamma = _reparam(params)
    i_neg = (x < 0.0).astype(jnp.float32)
    sig2_t = omega + x * x * (alpha + gamma * i_neg) + sig2_prev * beta
    c_new = f_gate * c + i_gate * c_sq
    proj = jnp.sum(jnp.tanh(c_new) * params["w"], axis=-1, keepdims=True)
    return sig2_t * (1.0 + proj), c_new, sig2_t


def reference_sequence(params, x_seq, sig2_h0, c0, sig2_prev0):
    def step(carry, x):
        s, c, sp = carry
        s_new, c_new, sig2_t = reference_cell(params, x, s, c, sp)
        return (s_new, c_new, sig2_t), s_new

    (s_f, c_f, sp_f), sig2_seq = jax.lax.scan(step, (sig2_h0, c0, sig2_prev0), x_seq)
    return sig2_seq, c_f, sp_f


# ----------------------------------------------------------------------------
if __name__ == "__main__":
    T, B, H = 8, 8, 32
    key = jax.random.PRNGKey(0)
    k_param, k_x, k_s, k_c = jax.random.split(key, 4)

    params = init_params(k_param, H)
    packed = pack_params(params)

    x_seq = jax.random.normal(k_x, (T, B, 1), jnp.float32) * 0.5      # demeaned inputs
    sig2_h0 = jnp.abs(jax.random.normal(k_s, (B, 1), jnp.float32)) * 0.1
    c0 = jax.random.normal(k_c, (B, H), jnp.float32) * 0.1            # hidden memory
    sig2_prev0 = jnp.zeros((B, 1), jnp.float32)                       # init_garch state

    # Fused-sequence kernel
    sig2_seq, c_fin, sig2p_fin = garch_lstm_sequence(packed, x_seq, sig2_h0, c0, sig2_prev0)
    jax.block_until_ready((sig2_seq, c_fin, sig2p_fin))

    ref_sig2_seq, ref_c, ref_sp = reference_sequence(params, x_seq, sig2_h0, c0, sig2_prev0)
    assert jnp.allclose(sig2_seq, ref_sig2_seq, atol=1e-4, rtol=1e-4)
    assert jnp.allclose(c_fin, ref_c, atol=1e-4, rtol=1e-4)
    assert jnp.allclose(sig2p_fin, ref_sp, atol=1e-4, rtol=1e-4)

    # Single-step check (original module forward semantics, T=1)
    s1, c1, sp1 = garch_lstm_cell(packed, x_seq[0], sig2_h0, c0, sig2_prev0)
    r1, rc1, rsp1 = reference_cell(params, x_seq[0], sig2_h0, c0, sig2_prev0)
    assert jnp.allclose(s1, r1, atol=1e-5, rtol=1e-5)
    assert jnp.allclose(c1, rc1, atol=1e-5, rtol=1e-5)
    assert jnp.allclose(sp1, rsp1, atol=1e-5, rtol=1e-5)

    print("KERNEL_OK")
</pallas_src>

<mosaic_0001>
module attributes {stable_mosaic.version = 11 : i64} {
  func.func @garch_lstm_seq_kernel(%arg0: memref<4xf32, #tpu.memory_space<smem>>, %arg1: memref<8x8x1xf32, #tpu.memory_space<vmem>>, %arg2: memref<8x1xf32, #tpu.memory_space<vmem>>, %arg3: memref<8x128xf32, #tpu.memory_space<vmem>>, %arg4: memref<8x1xf32, #tpu.memory_space<vmem>>, %arg5: memref<2x384xf32, #tpu.memory_space<vmem>>, %arg6: memref<1x384xf32, #tpu.memory_space<vmem>>, %arg7: memref<1x128xf32, #tpu.memory_space<vmem>>, %arg8: memref<8x8x1xf32, #tpu.memory_space<vmem>>, %arg9: memref<8x128xf32, #tpu.memory_space<vmem>>, %arg10: memref<8x1xf32, #tpu.memory_space<vmem>>) attributes {dimension_semantics = [], scalar_prefetch = 0 : i64, scratch_operands = 0 : i64, tpu.core_type = #tpu.core_type<tc>} {
    %c0 = arith.constant 0 : index
    %c0_0 = arith.constant 0 : index
    %0 = vector.load %arg5[%c0, %c0_0] : memref<2x384xf32, #tpu.memory_space<vmem>>, vector<1x384xf32>
    %c1 = arith.constant 1 : index
    %c0_1 = arith.constant 0 : index
    %1 = vector.load %arg5[%c1, %c0_1] : memref<2x384xf32, #tpu.memory_space<vmem>>, vector<1x384xf32>
    %c0_2 = arith.constant 0 : index
    %c0_3 = arith.constant 0 : index
    %2 = vector.load %arg6[%c0_2, %c0_3] : memref<1x384xf32, #tpu.memory_space<vmem>>, vector<1x384xf32>
    %c0_4 = arith.constant 0 : index
    %c0_5 = arith.constant 0 : index
    %3 = vector.load %arg7[%c0_4, %c0_5] : memref<1x128xf32, #tpu.memory_space<vmem>>, vector<1x128xf32>
    %c0_6 = arith.constant 0 : index
    %4 = memref.load %arg0[%c0_6] : memref<4xf32, #tpu.memory_space<smem>>
    %5 = vector.broadcast %4 : f32 to vector<8x1xf32>
    %c1_7 = arith.constant 1 : index
    %6 = memref.load %arg0[%c1_7] : memref<4xf32, #tpu.memory_space<smem>>
    %7 = vector.broadcast %6 : f32 to vector<8x1xf32>
    %c2 = arith.constant 2 : index
    %8 = memref.load %arg0[%c2] : memref<4xf32, #tpu.memory_space<smem>>
    %9 = vector.broadcast %8 : f32 to vector<8x1xf32>
    %c3 = arith.constant 3 : index
    %10 = memref.load %arg0[%c3] : memref<4xf32, #tpu.memory_space<smem>>
    %11 = vector.broadcast %10 : f32 to vector<8x1xf32>
    %c0_8 = arith.constant 0 : index
    %c0_9 = arith.constant 0 : index
    %12 = vector.load %arg2[%c0_8, %c0_9] : memref<8x1xf32, #tpu.memory_space<vmem>>, vector<8x1xf32>
    %c0_10 = arith.constant 0 : index
    %c0_11 = arith.constant 0 : index
    %13 = vector.load %arg3[%c0_10, %c0_11] : memref<8x128xf32, #tpu.memory_space<vmem>>, vector<8x128xf32>
    %c0_12 = arith.constant 0 : index
    %c0_13 = arith.constant 0 : index
    %14 = vector.load %arg4[%c0_12, %c0_13] : memref<8x1xf32, #tpu.memory_space<vmem>>, vector<8x1xf32>
    %c0_i32 = arith.constant 0 : i32
    %c8_i32 = arith.constant 8 : i32
    %15 = arith.addi %c0_i32, %c8_i32 : i32
    %c1_i32 = arith.constant 1 : i32
    %16:3 = scf.for %arg11 = %c0_i32 to %15 step %c1_i32 iter_args(%arg12 = %12, %arg13 = %13, %arg14 = %14) -> (vector<8x1xf32>, vector<8x128xf32>, vector<8x1xf32>)  : i32 {
      %19 = arith.index_cast %arg11 : i32 to index
      %c0_19 = arith.constant 0 : index
      %c0_20 = arith.constant 0 : index
      %20 = vector.load %arg1[%19, %c0_19, %c0_20] : memref<8x8x1xf32, #tpu.memory_space<vmem>>, vector<1x8x1xf32>
      %21 = vector.shape_cast %20 : vector<1x8x1xf32> to vector<8x1xf32>
      %22 = vector.broadcast %21 : vector<8x1xf32> to vector<8x384xf32>
      %23 = vector.broadcast %0 : vector<1x384xf32> to vector<8x384xf32>
      %24 = arith.mulf %22, %23 : vector<8x384xf32>
      %25 = vector.broadcast %arg12 : vector<8x1xf32> to vector<8x384xf32>
      %26 = vector.broadcast %1 : vector<1x384xf32> to vector<8x384xf32>
      %27 = arith.mulf %25, %26 : vector<8x384xf32>
      %28 = arith.addf %24, %27 : vector<8x384xf32>
      %29 = vector.broadcast %2 : vector<1x384xf32> to vector<8x384xf32>
      %30 = arith.addf %28, %29 : vector<8x384xf32>
      %31 = math.tanh %30 : vector<8x384xf32>
      %32 = vector.extract_strided_slice %31 {offsets = [0, 0], sizes = [8, 128], strides = [1, 1]} : vector<8x384xf32> to vector<8x128xf32>
      %cst = arith.constant 5.000000e-01 : f32
      %33 = vector.broadcast %cst : f32 to vector<8x128xf32>
      %34 = arith.mulf %33, %32 : vector<8x128xf32>
      %cst_21 = arith.constant 5.000000e-01 : f32
      %35 = vector.broadcast %cst_21 : f32 to vector<8x128xf32>
      %36 = arith.addf %34, %35 : vector<8x128xf32>
      %37 = vector.extract_strided_slice %31 {offsets = [0, 128], sizes = [8, 128], strides = [1, 1]} : vector<8x384xf32> to vector<8x128xf32>
      %cst_22 = arith.constant 5.000000e-01 : f32
      %38 = vector.broadcast %cst_22 : f32 to vector<8x128xf32>
      %39 = arith.mulf %38, %37 : vector<8x128xf32>
      %cst_23 = arith.constant 5.000000e-01 : f32
      %40 = vector.broadcast %cst_23 : f32 to vector<8x128xf32>
      %41 = arith.addf %39, %40 : vector<8x128xf32>
      %42 = vector.extract_strided_slice %31 {offsets = [0, 256], sizes = [8, 128], strides = [1, 1]} : vector<8x384xf32> to vector<8x128xf32>
      %cst_24 = arith.constant 0.000000e+00 : f32
      %43 = vector.broadcast %cst_24 : f32 to vector<8x1xf32>
      %44 = arith.cmpf olt, %21, %43 : vector<8x1xf32>
      %45 = arith.extui %44 : vector<8x1xi1> to vector<8x1xi32>
      %46 = arith.sitofp %45 : vector<8x1xi32> to vector<8x1xf32>
      %47 = arith.mulf %21, %21 : vector<8x1xf32>
      %48 = arith.mulf %11, %46 : vector<8x1xf32>
      %49 = arith.addf %7, %48 : vector<8x1xf32>
      %50 = arith.mulf %47, %49 : vector<8x1xf32>
      %51 = arith.addf %5, %50 : vector<8x1xf32>
      %52 = arith.mulf %arg14, %9 : vector<8x1xf32>
      %53 = arith.addf %51, %52 : vector<8x1xf32>
      %54 = arith.mulf %36, %arg13 : vector<8x128xf32>
      %55 = arith.mulf %41, %42 : vector<8x128xf32>
      %56 = arith.addf %54, %55 : vector<8x128xf32>
      %57 = math.tanh %56 : vector<8x128xf32>
      %58 = vector.broadcast %3 : vector<1x128xf32> to vector<8x128xf32>
      %59 = arith.mulf %57, %58 : vector<8x128xf32>
      %cst_25 = arith.constant dense<0.000000e+00> : vector<8xf32>
      %60 = vector.multi_reduction <add>, %59, %cst_25 [1] : vector<8x128xf32> to vector<8xf32>
      %61 = vector.shape_cast %60 : vector<8xf32> to vector<8x1xf32>
      %cst_26 = arith.constant 1.000000e+00 : f32
      %62 = vector.broadcast %cst_26 : f32 to vector<8x1xf32>
      %63 = arith.addf %62, %61 : vector<8x1xf32>
      %64 = arith.mulf %53, %63 : vector<8x1xf32>
      %65 = arith.index_cast %arg11 : i32 to index
      %c0_27 = arith.constant 0 : index
      %c0_28 = arith.constant 0 : index
      %66 = vector.load %arg8[%65, %c0_27, %c0_28] : memref<8x8x1xf32, #tpu.memory_space<vmem>>, vector<1x8x1xf32>
      %67 = vector.shape_cast %66 : vector<1x8x1xf32> to vector<8x1xf32>
      %68 = vector.shape_cast %64 : vector<8x1xf32> to vector<1x8x1xf32>
      tpu.vector_store %arg8[%65, %c0_27, %c0_28], %68 {strides = array<i32>} : memref<8x8x1xf32, #tpu.memory_space<vmem>>, vector<1x8x1xf32>,
      scf.yield %64, %56, %53 : vector<8x1xf32>, vector<8x128xf32>, vector<8x1xf32>
    }
    %c8_i32_14 = arith.constant 8 : i32
    %c0_15 = arith.constant 0 : index
    %c0_16 = arith.constant 0 : index
    %17 = vector.load %arg9[%c0_15, %c0_16] : memref<8x128xf32, #tpu.memory_space<vmem>>, vector<8x128xf32>
    tpu.vector_store %arg9[%c0_15, %c0_16], %16#1 {strides = array<i32>} : memref<8x128xf32, #tpu.memory_space<vmem>>, vector<8x128xf32>,
    %c0_17 = arith.constant 0 : index
    %c0_18 = arith.constant 0 : index
    %18 = vector.load %arg10[%c0_17, %c0_18] : memref<8x1xf32, #tpu.memory_space<vmem>>, vector<8x1xf32>
    tpu.vector_store %arg10[%c0_17, %c0_18], %16#2 {strides = array<i32>} : memref<8x1xf32, #tpu.memory_space<vmem>>, vector<8x1xf32>,
    return
  }
}

</mosaic_0001>

<llo_original>
// kernel: garch_lstm_sequence.1
$region0: #{garch_lstm_sequence.1}
  #allocation0 [shape = 'u32[]', space=smem, size = 0x4, offset = 0x4, fixed_abs, tag = 'smem constant byte address 0x4 - core index']
  #allocation1 [shape = 'u32[144,128]{1,0:T(1,128)}', space=vmem, size = 0x12000, scoped, tag = 'internal scratch']
  %s0 = inlined_call_operand.vmem [shape: f32[4], index: 0, kind: input, shape index: {}]
  %s1 = inlined_call_operand.vmem [shape: f32[8,8,1], index: 1, kind: input, shape index: {}]
  %s2 = inlined_call_operand.vmem [shape: f32[8,1], index: 2, kind: input, shape index: {}]
  %s3 = inlined_call_operand.vmem [shape: f32[8,128], index: 3, kind: input, shape index: {}]
  %s4 = inlined_call_operand.vmem [shape: f32[8,1], index: 4, kind: input, shape index: {}]
  %s5 = inlined_call_operand.vmem [shape: f32[2,384], index: 5, kind: input, shape index: {}]
  %s6 = inlined_call_operand.vmem [shape: f32[1,384], index: 6, kind: input, shape index: {}]
  %s7 = inlined_call_operand.vmem [shape: f32[1,128], index: 7, kind: input, shape index: {}]
  %s8 = inlined_call_operand.vmem [shape: f32[8,8,1], index: 8, kind: output, shape index: {0}]
  %s9 = inlined_call_operand.hbm [shape: f32[8,128], index: 9, kind: output, shape index: {1}]
  %s10 = inlined_call_operand.vmem [shape: f32[8,1], index: 10, kind: output, shape index: {2}]
  %11 = xla_tuple %s8, %s9, %s10
  %s12 = sld [smem:[#allocation0]]
  $region69: #{garch_lstm_sequence.1} parent=0
    _
  %s14 = ssub.s32 1, %s12
  %s15 = scalar_select 0, %s14, %s12
  $region1: #{garch_lstm_sequence.1} parent=0
    #allocation2 [shape = 'u8[512]{0}', space=smem, size = 0x200, scoped, tag = 'input window, operand 0, single buffered']
    #allocation3 [shape = 's32[1]{0}', space=sflag, size = 0x4, scoped, tag = 'scoped memory for garch_lstm_sequence.1']
    #allocation4 [shape = 's32[1]{0}', space=sflag, size = 0x4, scoped, tag = 'scoped memory for garch_lstm_sequence.1']
    #allocation5 [shape = 'u8[4096]{0}', space=vmem, size = 0x1000, scoped, tag = 'output window, operand 1, single buffered']
    %16 = vsyncpa [#allocation4], 0
    %17 = vsyncpa [#allocation3], 0
    // Predicated region
    $region2: #{garch_lstm_sequence.1} parent=1 // pred_check
      _
    $region3: #{garch_lstm_sequence.1} parent=1 // pred_check_branch
      %19 = sbr.rel (0) target = $region5
    $region4: #{garch_lstm_sequence.1} parent=1 // pred_region
      %s21 = ssub.s32 16, 16
      %22 = vsyncadd [#allocation4], %s21
      %s24 = sshll.u32 %s0, 4
      %s25 = int_to_ptr.vmem [resolvable:$true] %s24
      %27 = dma.vmem_to_smem %s25, 16, [#allocation2], [#allocation4]
    $region5: #{garch_lstm_sequence.1} parent=1 // pred_fallthru
      _
    // Predicated region
    $region6: #{garch_lstm_sequence.1} parent=1 // pred_check
      _
    $region7: #{garch_lstm_sequence.1} parent=1 // pred_check_branch
      %29 = sbr.rel (0) target = $region9
    $region8: #{garch_lstm_sequence.1} parent=1 // pred_region
      _
    $region9: #{garch_lstm_sequence.1} parent=1 // pred_fallthru
      _
    // Predicated region
    $region10: #{garch_lstm_sequence.1} parent=1 // pred_check
      _
    $region11: #{garch_lstm_sequence.1} parent=1 // pred_check_branch
      %31 = sbr.rel (0) target = $region13
    $region12: #{garch_lstm_sequence.1} parent=1 // pred_region
      _
    $region13: #{garch_lstm_sequence.1} parent=1 // pred_fallthru
      _
    // Predicated region
    $region14: #{garch_lstm_sequence.1} parent=1 // pred_check
      _
    $region15: #{garch_lstm_sequence.1} parent=1 // pred_check_branch
      %33 = sbr.rel (0) target = $region17
    $region16: #{garch_lstm_sequence.1} parent=1 // pred_region
      _
    $region17: #{garch_lstm_sequence.1} parent=1 // pred_fallthru
      _
    // Predicated region
    $region18: #{garch_lstm_sequence.1} parent=1 // pred_check
      _
    $region19: #{garch_lstm_sequence.1} parent=1 // pred_check_branch
      %35 = sbr.rel (0) target = $region21
    $region20: #{garch_lstm_sequence.1} parent=1 // pred_region
      _
    $region21: #{garch_lstm_sequence.1} parent=1 // pred_fallthru
      _
    // Predicated region
    $region22: #{garch_lstm_sequence.1} parent=1 // pred_check
      _
    $region23: #{garch_lstm_sequence.1} parent=1 // pred_check_branch
      %37 = sbr.rel (0) target = $region25
    $region24: #{garch_lstm_sequence.1} parent=1 // pred_region
      _
    $region25: #{garch_lstm_sequence.1} parent=1 // pred_fallthru
      _
    // Predicated region
    $region26: #{garch_lstm_sequence.1} parent=1 // pred_check
      _
    $region27: #{garch_lstm_sequence.1} parent=1 // pred_check_branch
      %39 = sbr.rel (0) target = $region29
    $region28: #{garch_lstm_sequence.1} parent=1 // pred_region
      _
    $region29: #{garch_lstm_sequence.1} parent=1 // pred_fallthru
      _
    // Predicated region
    $region30: #{garch_lstm_sequence.1} parent=1 // pred_check
      _
    $region31: #{garch_lstm_sequence.1} parent=1 // pred_check_branch
      %41 = sbr.rel (0) target = $region33
    $region32: #{garch_lstm_sequence.1} parent=1 // pred_region
      _
    $region33: #{garch_lstm_sequence.1} parent=1 // pred_fallthru
      _
    // Predicated region
    $region34: #{garch_lstm_sequence.1} parent=1 // pred_check
      _
    $region35: #{garch_lstm_sequence.1} parent=1 // pred_check_branch
      %43 = sbr.rel (0) target = $region37
    $region36: #{garch_lstm_sequence.1} parent=1 // pred_region
      %44 = dma.done [#allocation4], 16
    $region37: #{garch_lstm_sequence.1} parent=1 // pred_fallthru
      _
    %45 = sfence
    %v46 = vld [vmem:[%s5] ss:$2 sm:$0x7]
    %s47 = scalar_lea.vmem %s5, 1
    %v48 = vld [vmem:[%s47] ss:$2 sm:$0x7]
    %v49 = vld [vmem:[%s6] sm:$0x7]
    %v50 = vld [vmem:[%s7] sm:$0x1]
    %s51 = sld [smem:[#allocation2]]
    %v52 = vstv %s51
    %s53 = sld [smem:[#allocation2 + $0x1]]
    %v54 = vstv %s53
    %s55 = sld [smem:[#allocation2 + $0x2]]
    %v56 = vstv %s55
    %s57 = sld [smem:[#allocation2 + $0x3]]
    %v58 = vstv %s57
    %v59 = vld [vmem:[%s2] sm:$0xff]
    %v60 = vld [vmem:[%s3] sm:$0xff]
    %v61 = vld [vmem:[%s4] sm:$0xff]
    loop: start=0, step=1, limit=8
    $region38: #{garch_lstm_sequence.1} parent=1 // loop_pre_header
      _
    $region39: #{garch_lstm_sequence.1} parent=1 // loop_header
      %s63 = sphi 0, %s67
      %p64 = scmp.ge.s32.totalorder %s63, 8
      %v68 = vphi %v59, %v175
      %v69 = vphi %v60, %v163
      %v70 = vphi %v61, %v160
    $region40: #{garch_lstm_sequence.1} parent=1 // loop_header_branch
      %66 = sbr.rel (%p64) target = $region44
    $region41: #{garch_lstm_sequence.1} parent=1 // loop_body
      %s71 = smul.u32 %s63, 8
      %s72 = scalar_lea.vmem %s1, %s71
      %v73 = vld [vmem:[%s72] sm:$0xff]
      %75 = vset.pattern.permute.xlu0 0
      %76 = vperm.xlu0 %75, %v73
      %v77 = vpop.permute.xlu0 %76
      %v80 = vlaneseq
      %v81 = vshrl.u32 %v80, 7
      %v82 = vsub.s32 0, %v81
      %v83 = vrot.slane %v46, %v82
      %v84 = vlaneseq
      %v85 = vshrl.u32 %v84, 7
      %v86 = vsub.s32 1, %v85
      %v87 = vrot.slane %v46, %v86
      %v88 = vlaneseq
      %v89 = vshrl.u32 %v88, 7
      %v90 = vsub.s32 2, %v89
      %v91 = vrot.slane %v46, %v90
      %v95 = vmul.f32 %v77, %v83
      %v96 = vmul.f32 %v77, %v87
      %v97 = vmul.f32 %v77, %v91
      %99 = vset.pattern.permute.xlu0 0
      %100 = vperm.xlu0 %99, %v68
      %v101 = vpop.permute.xlu0 %100
      %v104 = vlaneseq
      %v105 = vshrl.u32 %v104, 7
      %v106 = vsub.s32 0, %v105
      %v107 = vrot.slane %v48, %v106
      %v108 = vlaneseq
      %v109 = vshrl.u32 %v108, 7
      %v110 = vsub.s32 1, %v109
      %v111 = vrot.slane %v48, %v110
      %v112 = vlaneseq
      %v113 = vshrl.u32 %v112, 7
      %v114 = vsub.s32 2, %v113
      %v115 = vrot.slane %v48, %v114
      %v119 = vmul.f32 %v101, %v107
      %v120 = vmul.f32 %v101, %v111
      %v121 = vmul.f32 %v101, %v115
      %v122 = vadd.f32 %v95, %v119
      %v123 = vadd.f32 %v96, %v120
      %v124 = vadd.f32 %v97, %v121
      %v126 = vlaneseq
      %v127 = vshrl.u32 %v126, 7
      %v128 = vsub.s32 0, %v127
      %v129 = vrot.slane %v49, %v128
      %v130 = vlaneseq
      %v131 = vshrl.u32 %v130, 7
      %v132 = vsub.s32 1, %v131
      %v133 = vrot.slane %v49, %v132
      %v134 = vlaneseq
      %v135 = vshrl.u32 %v134, 7
      %v136 = vsub.s32 2, %v135
      %v137 = vrot.slane %v49, %v136
      %v141 = vadd.f32 %v122, %v129
      %v142 = vadd.f32 %v123, %v133
      %v143 = vadd.f32 %v124, %v137
      %v144 = vtanh.pop %v141
      %v145 = vtanh.pop %v142
      %v146 = vtanh.pop %v143
      %v147 = vmul.f32 %v144, 0.5
      %v148 = vadd.f32 %v147, 0.5
      %v149 = vmul.f32 %v145, 0.5
      %v150 = vadd.f32 %v149, 0.5
      %vm151 = vcmp.lt.f32.partialorder %v73, 0.0
      %v152 = vsel %vm151, 1, 0
      %v153 = vcvt.s32.f32 %v152
      %v154 = vmul.f32 %v73, %v73
      %v155 = vmul.f32 %v58, %v153
      %v156 = vadd.f32 %v54, %v155
      %v157 = vmul.f32 %v154, %v156
      %v158 = vadd.f32 %v52, %v157
      %v159 = vmul.f32 %v70, %v56
      %v160 = vadd.f32 %v158, %v159
      %v161 = vmul.f32 %v148, %v69
      %v162 = vmul.f32 %v150, %v146
      %v163 = vadd.f32 %v161, %v162
      %v164 = vtanh.pop %v163
      %v166 = vlaneseq
      %v167 = vshrl.u32 %v166, 7
      %v168 = vsub.s32 0, %v167
      %v169 = vrot.slane %v50, %v168
      %v171 = vmul.f32 %v164, %v169
      %172 = vadd.xlane.f32.xlu0 %v171
      %v173 = vpop.xlane.xlu0 %172
      %v174 = vadd.f32 %v173, 1.0
      %v175 = vmul.f32 %v160, %v174
      %s176 = scalar_lea.vmem %s8, %s71
      %vm177 = vcmask 7168
      %178 = vst.msk [vmem:[%s176] sm:$0xff] %vm177, %v175
    $region42: #{garch_lstm_sequence.1} parent=1 // loop_footer
      %s67 = sadd.s32 1, %s63
    $region43: #{garch_lstm_sequence.1} parent=1 // loop_footer_branch
      %62 = sbr.rel target = $region39
    $region44: #{garch_lstm_sequence.1} parent=1 // loop_exit
      _
    %179 = vst [vmem:[#allocation5] sm:$0xff] %v69
    %vm180 = vcmask 7168
    %181 = vst.msk [vmem:[%s10] sm:$0xff] %vm180, %v70
    // Predicated region
    $region45: #{garch_lstm_sequence.1} parent=1 // pred_check
      _
    $region46: #{garch_lstm_sequence.1} parent=1 // pred_check_branch
      %183 = sbr.rel (0) target = $region48
    $region47: #{garch_lstm_sequence.1} parent=1 // pred_region
      _
    $region48: #{garch_lstm_sequence.1} parent=1 // pred_fallthru
      _
    // Predicated region
    $region49: #{garch_lstm_sequence.1} parent=1 // pred_check
      _
    $region50: #{garch_lstm_sequence.1} parent=1 // pred_check_branch
      %185 = sbr.rel (0) target = $region52
    $region51: #{garch_lstm_sequence.1} parent=1 // pred_region
      %s187 = ssub.s32 128, 128
      %188 = vsyncadd [#allocation3], %s187
      %s190 = sshll.u32 [#allocation5], 4
      %s191 = int_to_ptr.vmem [resolvable:$true] %s190
      %193 = dma.vmem_to_hbm [thread:$0]  %s191, 128, %s9, [#allocation3]
    $region52: #{garch_lstm_sequence.1} parent=1 // pred_fallthru
      _
    // Predicated region
    $region53: #{garch_lstm_sequence.1} parent=1 // pred_check
      _
    $region54: #{garch_lstm_sequence.1} parent=1 // pred_check_branch
      %195 = sbr.rel (0) target = $region56
    $region55: #{garch_lstm_sequence.1} parent=1 // pred_region
      _
    $region56: #{garch_lstm_sequence.1} parent=1 // pred_fallthru
      _
    // Predicated region
    $region57: #{garch_lstm_sequence.1} parent=1 // pred_check
      _
    $region58: #{garch_lstm_sequence.1} parent=1 // pred_check_branch
      %197 = sbr.rel (0) target = $region60
    $region59: #{garch_lstm_sequence.1} parent=1 // pred_region
      _
    $region60: #{garch_lstm_sequence.1} parent=1 // pred_fallthru
      _
    // Predicated region
    $region61: #{garch_lstm_sequence.1} parent=1 // pred_check
      _
    $region62: #{garch_lstm_sequence.1} parent=1 // pred_check_branch
      %199 = sbr.rel (0) target = $region64
    $region63: #{garch_lstm_sequence.1} parent=1 // pred_region
      %200 = dma.done [#allocation3], 128
    $region64: #{garch_lstm_sequence.1} parent=1 // pred_fallthru
      _
    // Predicated region
    $region65: #{garch_lstm_sequence.1} parent=1 // pred_check
      _
    $region66: #{garch_lstm_sequence.1} parent=1 // pred_check_branch
      %202 = sbr.rel (0) target = $region68
    $region67: #{garch_lstm_sequence.1} parent=1 // pred_region
      _
    $region68: #{garch_lstm_sequence.1} parent=1 // pred_fallthru
      _
    %203 = vsyncpa [#allocation3], 1
    %204 = vsyncpa [#allocation4], 1

</llo_original>
